<compile_context>
chip_gen: v7x
topology: tpu7x:2x2x1
jax: 0.10.0
libtpu: 0.0.40
codegen_flags: <defaults>
</compile_context>

<pallas_src>
import functools

import jax
import jax.numpy as jnp
from jax.experimental import pallas as pl
from jax.experimental.pallas import tpu as pltpu

BN_EPS = 1e-5
_VMEM_LIMIT_BYTES = 32 * 1024 * 1024   # >= default scoped VMEM on v5e/v6e/v7x


def _largest_divisor_tile(dim, align, max_tile):
    """Largest multiple of `align` that divides `dim`, capped at `max_tile`.
    Falls back to the full extent when `dim` is not a multiple of `align`
    (a full-extent block is always legal on TPU)."""
    if dim % align != 0:
        return dim
    cap = min(dim, max(align, max_tile))
    best = align
    t = align
    while t <= cap:
        if dim % t == 0:
            best = t
        t += align
    return best


def _const_spec(shape):
    """Whole-array block with a constant index map (fetched once, resident)."""
    n = len(shape)
    return pl.BlockSpec(shape, lambda li, _n=n: (0,) * _n)


# --------------------------------------------------------------------------
# Phase 1: GAP reduction over L + gate MLP on the last reduction step.
# --------------------------------------------------------------------------
def _gap_gate_kernel(x_ref, w1p_ref, w1n_ref, b1_ref, g1_ref, be1_ref,
                     w2_ref, b2_ref, g2_ref, be2_ref,
                     gate_ref, pos_acc, tot_acc, *, inv_len):
    li = pl.program_id(0)

    @pl.when(li == 0)
    def _init():
        pos_acc[...] = jnp.zeros_like(pos_acc)
        tot_acc[...] = jnp.zeros_like(tot_acc)

    # Accumulate sum(relu(x)) and sum(x); the negative-part sum is recovered as
    # tot - pos, avoiding a second full-size temporary and a second cross-lane
    # reduction per tile.
    x = x_ref[...].astype(jnp.float32)                   # (N, C, L_tile)
    pos_acc[...] += jnp.sum(jnp.maximum(x, 0.0), axis=-1)
    tot_acc[...] += jnp.sum(x, axis=-1)

    @pl.when(li == pl.num_programs(0) - 1)
    def _finalize():
        pos_mean = pos_acc[...] * inv_len                    # (N, C)
        neg_mean = (tot_acc[...] - pos_acc[...]) * inv_len   # (N, C)

        # Linear(2C -> 2C) with w1 pre-split on the host:
        #   concat([pos, neg]) @ W1 == pos @ W1[:C] + neg @ W1[C:]
        h = (jnp.dot(pos_mean, w1p_ref[...], preferred_element_type=jnp.float32)
             + jnp.dot(neg_mean, w1n_ref[...], preferred_element_type=jnp.float32)
             + b1_ref[...])                                  # (N, 2C)

        # BatchNorm1d(2C), training-mode batch statistics (biased variance)
        mu1 = jnp.mean(h, axis=0, keepdims=True)
        var1 = jnp.mean((h - mu1) * (h - mu1), axis=0, keepdims=True)
        h = g1_ref[...] * (h - mu1) * jax.lax.rsqrt(var1 + BN_EPS) + be1_ref[...]

        # ReLU
        h = jnp.maximum(h, 0.0)

        # Linear(2C -> C)
        h2 = (jnp.dot(h, w2_ref[...], preferred_element_type=jnp.float32)
              + b2_ref[...])                                 # (N, C)

        # BatchNorm1d(C), training-mode batch statistics
        mu2 = jnp.mean(h2, axis=0, keepdims=True)
        var2 = jnp.mean((h2 - mu2) * (h2 - mu2), axis=0, keepdims=True)
        h2 = g2_ref[...] * (h2 - mu2) * jax.lax.rsqrt(var2 + BN_EPS) + be2_ref[...]

        gate_ref[...] = jax.nn.sigmoid(h2)                   # (N, C)


def _compute_gate(x, params):
    N, C, L = x.shape
    # Lane-dense L tile dividing L, sized so one (N, C, L_tile) f32 tile stays
    # ~<= 4 MiB (double-buffering doubles that; well under the scoped limit).
    budget_elems = (4 * 1024 * 1024) // 4
    lt = _largest_divisor_tile(L, 128, max(128, budget_elems // max(1, N * C)))
    grid = (L // lt,)

    kernel = functools.partial(_gap_gate_kernel, inv_len=1.0 / L)
    return pl.pallas_call(
        kernel,
        out_shape=jax.ShapeDtypeStruct((N, C), jnp.float32),
        grid_spec=pltpu.PrefetchScalarGridSpec(
            num_scalar_prefetch=0,
            grid=grid,
            in_specs=[
                pl.BlockSpec((N, C, lt), lambda li: (0, 0, li)),
                _const_spec(params["w1p"].shape),
                _const_spec(params["w1n"].shape),
                _const_spec(params["b1"].shape),
                _const_spec(params["g1"].shape),
                _const_spec(params["be1"].shape),
                _const_spec(params["w2"].shape),
                _const_spec(params["b2"].shape),
                _const_spec(params["g2"].shape),
                _const_spec(params["be2"].shape),
            ],
            out_specs=pl.BlockSpec((N, C), lambda li: (0, 0)),
            scratch_shapes=[pltpu.VMEM((N, C), jnp.float32),
                            pltpu.VMEM((N, C), jnp.float32)],
        ),
        compiler_params=pltpu.CompilerParams(
            dimension_semantics=("arbitrary",),
            vmem_limit_bytes=_VMEM_LIMIT_BYTES,
        ),
    )(x, params["w1p"], params["w1n"], params["b1"], params["g1"], params["be1"],
      params["w2"], params["b2"], params["g2"], params["be2"])


# --------------------------------------------------------------------------
# Phase 2: elementwise combine  out = where(x > 0, x, gate * x)
# --------------------------------------------------------------------------
def _combine_kernel(x_ref, s_ref, o_ref):
    x = x_ref[...]                    # (1, C_tile, L_tile)
    s = s_ref[...]                    # (1, C_tile, 1) — C on sublanes
    o_ref[...] = jnp.where(x > 0, x, s * x).astype(o_ref.dtype)


def _apply_gate(x, gate):
    N, C, L = x.shape
    lt = _largest_divisor_tile(L, 128, 2048)
    budget_elems = (2 * 1024 * 1024) // 4
    ct = _largest_divisor_tile(C, 8, max(8, budget_elems // lt))
    grid = (N, C // ct, L // lt)

    gate3 = gate.reshape(N, C, 1)     # channels onto sublanes; lane broadcast in-kernel
    return pl.pallas_call(
        _combine_kernel,
        out_shape=jax.ShapeDtypeStruct((N, C, L), x.dtype),
        grid_spec=pltpu.PrefetchScalarGridSpec(
            num_scalar_prefetch=0,
            grid=grid,
            in_specs=[
                pl.BlockSpec((1, ct, lt), lambda n, ci, li: (n, ci, li)),
                pl.BlockSpec((1, ct, 1), lambda n, ci, li: (n, ci, 0)),
            ],
            out_specs=pl.BlockSpec((1, ct, lt), lambda n, ci, li: (n, ci, li)),
        ),
        compiler_params=pltpu.CompilerParams(
            dimension_semantics=("parallel", "parallel", "parallel"),
            vmem_limit_bytes=_VMEM_LIMIT_BYTES,
        ),
    )(x, gate3)


def aprelu_forward(x, params):
    """x: (N, C, L) float32. params: dict from init_params."""
    gate = _compute_gate(x, params)          # (N, C)
    return _apply_gate(x, gate)              # (N, C, L)


# --------------------------------------------------------------------------
# Reference + init + self-test
# --------------------------------------------------------------------------
def _reference(x, p):
    posx = jnp.maximum(x, 0.0)
    negx = jnp.minimum(x, 0.0)
    w1 = jnp.concatenate([p["w1p"], p["w1n"]], axis=0)              # (2C, 2C)
    z = jnp.concatenate([posx.mean(-1), negx.mean(-1)], axis=1)     # (N, 2C)
    h = z @ w1 + p["b1"]
    mu = h.mean(0, keepdims=True)
    var = ((h - mu) ** 2).mean(0, keepdims=True)
    h = p["g1"] * (h - mu) * jax.lax.rsqrt(var + BN_EPS) + p["be1"]
    h = jnp.maximum(h, 0.0)
    h2 = h @ p["w2"] + p["b2"]
    mu2 = h2.mean(0, keepdims=True)
    var2 = ((h2 - mu2) ** 2).mean(0, keepdims=True)
    h2 = p["g2"] * (h2 - mu2) * jax.lax.rsqrt(var2 + BN_EPS) + p["be2"]
    s = jax.nn.sigmoid(h2)
    return posx + s[:, :, None] * negx


def init_params(key, channels):
    """Deterministic synthetic init. Linear weights stored (in, out);
    w1 is pre-split into its pos/neg input halves on the host."""
    C = channels
    k1, k2, k3, k4 = jax.random.split(key, 4)
    bound1 = 1.0 / jnp.sqrt(2.0 * C)
    bound2 = 1.0 / jnp.sqrt(2.0 * C)
    w1 = jax.random.uniform(k1, (2 * C, 2 * C), jnp.float32, -bound1, bound1)
    return {
        "w1p": w1[:C, :],                                   # (C, 2C)
        "w1n": w1[C:, :],                                   # (C, 2C)
        "b1": jax.random.uniform(k2, (1, 2 * C), jnp.float32, -bound1, bound1),
        "g1": jnp.ones((1, 2 * C), jnp.float32),
        "be1": jnp.zeros((1, 2 * C), jnp.float32),
        "w2": jax.random.uniform(k3, (2 * C, C), jnp.float32, -bound2, bound2),
        "b2": jax.random.uniform(k4, (1, C), jnp.float32, -bound2, bound2),
        "g2": jnp.ones((1, C), jnp.float32),
        "be2": jnp.zeros((1, C), jnp.float32),
    }


if __name__ == "__main__":
    N, C, L = 2, 4, 16
    key = jax.random.PRNGKey(0)
    kx, kp = jax.random.split(key)
    x = jax.random.normal(kx, (N, C, L), dtype=jnp.float32)
    params = init_params(kp, C)

    out = jax.block_until_ready(aprelu_forward(x, params))
    ref = _reference(x, params)
    assert out.shape == (N, C, L)
    assert jnp.allclose(out, ref, atol=1e-5, rtol=1e-5), "mismatch vs reference"

    print("KERNEL_OK")
</pallas_src>

<mosaic_0001>
module attributes {stable_mosaic.version = 11 : i64} {
  func.func @_gap_gate_kernel(%arg0: i32, %arg1: memref<2x4x16xf32, #tpu.memory_space<vmem>>, %arg2: memref<4x8xf32, #tpu.memory_space<vmem>>, %arg3: memref<4x8xf32, #tpu.memory_space<vmem>>, %arg4: memref<1x8xf32, #tpu.memory_space<vmem>>, %arg5: memref<1x8xf32, #tpu.memory_space<vmem>>, %arg6: memref<1x8xf32, #tpu.memory_space<vmem>>, %arg7: memref<8x4xf32, #tpu.memory_space<vmem>>, %arg8: memref<1x4xf32, #tpu.memory_space<vmem>>, %arg9: memref<1x4xf32, #tpu.memory_space<vmem>>, %arg10: memref<1x4xf32, #tpu.memory_space<vmem>>, %arg11: memref<2x4xf32, #tpu.memory_space<vmem>>, %arg12: memref<2x4xf32, #tpu.memory_space<vmem>>, %arg13: memref<2x4xf32, #tpu.memory_space<vmem>>) attributes {dimension_semantics = [#tpu.dimension_semantics<arbitrary>], iteration_bounds = array<i64: 1>, scalar_prefetch = 0 : i64, scratch_operands = 2 : i64, tpu.core_type = #tpu.core_type<tc>, window_params = [{transform_indices = @transform_0, window_bounds = array<i64: 2, 4, 16>}, {pipeline_mode = #tpu.pipeline_mode<synchronous>, transform_indices = @transform_1, window_bounds = array<i64: 4, 8>}, {pipeline_mode = #tpu.pipeline_mode<synchronous>, transform_indices = @transform_2, window_bounds = array<i64: 4, 8>}, {pipeline_mode = #tpu.pipeline_mode<synchronous>, transform_indices = @transform_3, window_bounds = array<i64: 1, 8>}, {pipeline_mode = #tpu.pipeline_mode<synchronous>, transform_indices = @transform_4, window_bounds = array<i64: 1, 8>}, {pipeline_mode = #tpu.pipeline_mode<synchronous>, transform_indices = @transform_5, window_bounds = array<i64: 1, 8>}, {pipeline_mode = #tpu.pipeline_mode<synchronous>, transform_indices = @transform_6, window_bounds = array<i64: 8, 4>}, {pipeline_mode = #tpu.pipeline_mode<synchronous>, transform_indices = @transform_7, window_bounds = array<i64: 1, 4>}, {pipeline_mode = #tpu.pipeline_mode<synchronous>, transform_indices = @transform_8, window_bounds = array<i64: 1, 4>}, {pipeline_mode = #tpu.pipeline_mode<synchronous>, transform_indices = @transform_9, window_bounds = array<i64: 1, 4>}, {pipeline_mode = #tpu.pipeline_mode<synchronous>, transform_indices = @transform_10, window_bounds = array<i64: 2, 4>}]} {
    %c0_i32 = arith.constant 0 : i32
    %0 = arith.cmpi eq, %arg0, %c0_i32 : i32
    %1 = arith.extui %0 : i1 to i32
    %c0_i32_0 = arith.constant 0 : i32
    %2 = arith.cmpi ne, %1, %c0_i32_0 : i32
    scf.if %2 {
      %cst_15 = arith.constant 0.000000e+00 : f32
      %17 = vector.broadcast %cst_15 : f32 to vector<2x4xf32>
      %c0_16 = arith.constant 0 : index
      %c0_17 = arith.constant 0 : index
      %18 = vector.load %arg12[%c0_16, %c0_17] : memref<2x4xf32, #tpu.memory_space<vmem>>, vector<2x4xf32>
      tpu.vector_store %arg12[%c0_16, %c0_17], %17 {strides = array<i32>} : memref<2x4xf32, #tpu.memory_space<vmem>>, vector<2x4xf32>,
      %cst_18 = arith.constant 0.000000e+00 : f32
      %19 = vector.broadcast %cst_18 : f32 to vector<2x4xf32>
      %c0_19 = arith.constant 0 : index
      %c0_20 = arith.constant 0 : index
      %20 = vector.load %arg13[%c0_19, %c0_20] : memref<2x4xf32, #tpu.memory_space<vmem>>, vector<2x4xf32>
      tpu.vector_store %arg13[%c0_19, %c0_20], %19 {strides = array<i32>} : memref<2x4xf32, #tpu.memory_space<vmem>>, vector<2x4xf32>,
    } else {
    }
    %c0 = arith.constant 0 : index
    %c0_1 = arith.constant 0 : index
    %c0_2 = arith.constant 0 : index
    %3 = vector.load %arg1[%c0, %c0_1, %c0_2] : memref<2x4x16xf32, #tpu.memory_space<vmem>>, vector<2x4x16xf32>
    %c0_3 = arith.constant 0 : index
    %c0_4 = arith.constant 0 : index
    %4 = vector.load %arg12[%c0_3, %c0_4] : memref<2x4xf32, #tpu.memory_space<vmem>>, vector<2x4xf32>
    %cst = arith.constant 0.000000e+00 : f32
    %5 = vector.broadcast %cst : f32 to vector<2x4x16xf32>
    %6 = arith.maximumf %3, %5 : vector<2x4x16xf32>
    %cst_5 = arith.constant dense<0.000000e+00> : vector<2x4xf32>
    %7 = vector.multi_reduction <add>, %6, %cst_5 [2] : vector<2x4x16xf32> to vector<2x4xf32>
    %8 = arith.addf %4, %7 : vector<2x4xf32>
    %c0_6 = arith.constant 0 : index
    %c0_7 = arith.constant 0 : index
    %9 = vector.load %arg12[%c0_6, %c0_7] : memref<2x4xf32, #tpu.memory_space<vmem>>, vector<2x4xf32>
    tpu.vector_store %arg12[%c0_6, %c0_7], %8 {strides = array<i32>} : memref<2x4xf32, #tpu.memory_space<vmem>>, vector<2x4xf32>,
    %c0_8 = arith.constant 0 : index
    %c0_9 = arith.constant 0 : index
    %10 = vector.load %arg13[%c0_8, %c0_9] : memref<2x4xf32, #tpu.memory_space<vmem>>, vector<2x4xf32>
    %cst_10 = arith.constant dense<0.000000e+00> : vector<2x4xf32>
    %11 = vector.multi_reduction <add>, %3, %cst_10 [2] : vector<2x4x16xf32> to vector<2x4xf32>
    %12 = arith.addf %10, %11 : vector<2x4xf32>
    %c0_11 = arith.constant 0 : index
    %c0_12 = arith.constant 0 : index
    %13 = vector.load %arg13[%c0_11, %c0_12] : memref<2x4xf32, #tpu.memory_space<vmem>>, vector<2x4xf32>
    tpu.vector_store %arg13[%c0_11, %c0_12], %12 {strides = array<i32>} : memref<2x4xf32, #tpu.memory_space<vmem>>, vector<2x4xf32>,
    %c0_i32_13 = arith.constant 0 : i32
    %14 = arith.cmpi eq, %arg0, %c0_i32_13 : i32
    %15 = arith.extui %14 : i1 to i32
    %c0_i32_14 = arith.constant 0 : i32
    %16 = arith.cmpi ne, %15, %c0_i32_14 : i32
    scf.if %16 {
      %c0_15 = arith.constant 0 : index
      %c0_16 = arith.constant 0 : index
      %17 = vector.load %arg12[%c0_15, %c0_16] : memref<2x4xf32, #tpu.memory_space<vmem>>, vector<2x4xf32>
      %cst_17 = arith.constant 6.250000e-02 : f32
      %18 = vector.broadcast %cst_17 : f32 to vector<2x4xf32>
      %19 = arith.mulf %17, %18 : vector<2x4xf32>
      %c0_18 = arith.constant 0 : index
      %c0_19 = arith.constant 0 : index
      %20 = vector.load %arg13[%c0_18, %c0_19] : memref<2x4xf32, #tpu.memory_space<vmem>>, vector<2x4xf32>
      %c0_20 = arith.constant 0 : index
      %c0_21 = arith.constant 0 : index
      %21 = vector.load %arg12[%c0_20, %c0_21] : memref<2x4xf32, #tpu.memory_space<vmem>>, vector<2x4xf32>
      %22 = arith.subf %20, %21 : vector<2x4xf32>
      %cst_22 = arith.constant 6.250000e-02 : f32
      %23 = vector.broadcast %cst_22 : f32 to vector<2x4xf32>
      %24 = arith.mulf %22, %23 : vector<2x4xf32>
      %c0_23 = arith.constant 0 : index
      %c0_24 = arith.constant 0 : index
      %25 = vector.load %arg2[%c0_23, %c0_24] : memref<4x8xf32, #tpu.memory_space<vmem>>, vector<4x8xf32>
      %cst_25 = arith.constant dense<0.000000e+00> : vector<2x8xf32>
      %26 = tpu.matmul %19, %25, %cst_25 {dimension_numbers = #tpu.dot_dimension_numbers<[1], [0], [0], [1], [0, 0, 1, 1], [], []>} : vector<2x4xf32>, vector<4x8xf32>, vector<2x8xf32> -> vector<2x8xf32>
      %c0_26 = arith.constant 0 : index
      %c0_27 = arith.constant 0 : index
      %27 = vector.load %arg3[%c0_26, %c0_27] : memref<4x8xf32, #tpu.memory_space<vmem>>, vector<4x8xf32>
      %cst_28 = arith.constant dense<0.000000e+00> : vector<2x8xf32>
      %28 = tpu.matmul %24, %27, %cst_28 {dimension_numbers = #tpu.dot_dimension_numbers<[1], [0], [0], [1], [0, 0, 1, 1], [], []>} : vector<2x4xf32>, vector<4x8xf32>, vector<2x8xf32> -> vector<2x8xf32>
      %29 = arith.addf %26, %28 : vector<2x8xf32>
      %c0_29 = arith.constant 0 : index
      %c0_30 = arith.constant 0 : index
      %30 = vector.load %arg4[%c0_29, %c0_30] : memref<1x8xf32, #tpu.memory_space<vmem>>, vector<1x8xf32>
      %31 = vector.broadcast %30 : vector<1x8xf32> to vector<2x8xf32>
      %32 = arith.addf %29, %31 : vector<2x8xf32>
      %cst_31 = arith.constant dense<0.000000e+00> : vector<8xf32>
      %33 = vector.multi_reduction <add>, %32, %cst_31 [0] : vector<2x8xf32> to vector<8xf32>
      %34 = vector.shape_cast %33 : vector<8xf32> to vector<1x8xf32>
      %cst_32 = arith.constant 2.000000e+00 : f32
      %35 = vector.broadcast %cst_32 : f32 to vector<1x8xf32>
      %36 = arith.divf %34, %35 : vector<1x8xf32>
      %37 = vector.broadcast %36 : vector<1x8xf32> to vector<2x8xf32>
      %38 = arith.subf %32, %37 : vector<2x8xf32>
      %39 = vector.broadcast %36 : vector<1x8xf32> to vector<2x8xf32>
      %40 = arith.subf %32, %39 : vector<2x8xf32>
      %41 = arith.mulf %38, %40 : vector<2x8xf32>
      %cst_33 = arith.constant dense<0.000000e+00> : vector<8xf32>
      %42 = vector.multi_reduction <add>, %41, %cst_33 [0] : vector<2x8xf32> to vector<8xf32>
      %43 = vector.shape_cast %42 : vector<8xf32> to vector<1x8xf32>
      %cst_34 = arith.constant 2.000000e+00 : f32
      %44 = vector.broadcast %cst_34 : f32 to vector<1x8xf32>
      %45 = arith.divf %43, %44 : vector<1x8xf32>
      %c0_35 = arith.constant 0 : index
      %c0_36 = arith.constant 0 : index
      %46 = vector.load %arg5[%c0_35, %c0_36] : memref<1x8xf32, #tpu.memory_space<vmem>>, vector<1x8xf32>
      %47 = vector.broadcast %36 : vector<1x8xf32> to vector<2x8xf32>
      %48 = arith.subf %32, %47 : vector<2x8xf32>
      %49 = vector.broadcast %46 : vector<1x8xf32> to vector<2x8xf32>
      %50 = arith.mulf %49, %48 : vector<2x8xf32>
      %cst_37 = arith.constant 9.99999974E-6 : f32
      %51 = vector.broadcast %cst_37 : f32 to vector<1x8xf32>
      %52 = arith.addf %45, %51 : vector<1x8xf32>
      %53 = math.rsqrt %52 : vector<1x8xf32>
      %54 = vector.broadcast %53 : vector<1x8xf32> to vector<2x8xf32>
      %55 = arith.mulf %50, %54 : vector<2x8xf32>
      %c0_38 = arith.constant 0 : index
      %c0_39 = arith.constant 0 : index
      %56 = vector.load %arg6[%c0_38, %c0_39] : memref<1x8xf32, #tpu.memory_space<vmem>>, vector<1x8xf32>
      %57 = vector.broadcast %56 : vector<1x8xf32> to vector<2x8xf32>
      %58 = arith.addf %55, %57 : vector<2x8xf32>
      %cst_40 = arith.constant 0.000000e+00 : f32
      %59 = vector.broadcast %cst_40 : f32 to vector<2x8xf32>
      %60 = arith.maximumf %58, %59 : vector<2x8xf32>
      %c0_41 = arith.constant 0 : index
      %c0_42 = arith.constant 0 : index
      %61 = vector.load %arg7[%c0_41, %c0_42] : memref<8x4xf32, #tpu.memory_space<vmem>>, vector<8x4xf32>
      %cst_43 = arith.constant dense<0.000000e+00> : vector<2x4xf32>
      %62 = tpu.matmul %60, %61, %cst_43 {dimension_numbers = #tpu.dot_dimension_numbers<[1], [0], [0], [1], [0, 0, 1, 1], [], []>} : vector<2x8xf32>, vector<8x4xf32>, vector<2x4xf32> -> vector<2x4xf32>
      %c0_44 = arith.constant 0 : index
      %c0_45 = arith.constant 0 : index
      %63 = vector.load %arg8[%c0_44, %c0_45] : memref<1x4xf32, #tpu.memory_space<vmem>>, vector<1x4xf32>
      %64 = vector.broadcast %63 : vector<1x4xf32> to vector<2x4xf32>
      %65 = arith.addf %62, %64 : vector<2x4xf32>
      %cst_46 = arith.constant dense<0.000000e+00> : vector<4xf32>
      %66 = vector.multi_reduction <add>, %65, %cst_46 [0] : vector<2x4xf32> to vector<4xf32>
      %67 = vector.shape_cast %66 : vector<4xf32> to vector<1x4xf32>
      %cst_47 = arith.constant 2.000000e+00 : f32
      %68 = vector.broadcast %cst_47 : f32 to vector<1x4xf32>
      %69 = arith.divf %67, %68 : vector<1x4xf32>
      %70 = vector.broadcast %69 : vector<1x4xf32> to vector<2x4xf32>
      %71 = arith.subf %65, %70 : vector<2x4xf32>
      %72 = vector.broadcast %69 : vector<1x4xf32> to vector<2x4xf32>
      %73 = arith.subf %65, %72 : vector<2x4xf32>
      %74 = arith.mulf %71, %73 : vector<2x4xf32>
      %cst_48 = arith.constant dense<0.000000e+00> : vector<4xf32>
      %75 = vector.multi_reduction <add>, %74, %cst_48 [0] : vector<2x4xf32> to vector<4xf32>
      %76 = vector.shape_cast %75 : vector<4xf32> to vector<1x4xf32>
      %cst_49 = arith.constant 2.000000e+00 : f32
      %77 = vector.broadcast %cst_49 : f32 to vector<1x4xf32>
      %78 = arith.divf %76, %77 : vector<1x4xf32>
      %c0_50 = arith.constant 0 : index
      %c0_51 = arith.constant 0 : index
      %79 = vector.load %arg9[%c0_50, %c0_51] : memref<1x4xf32, #tpu.memory_space<vmem>>, vector<1x4xf32>
      %80 = vector.broadcast %69 : vector<1x4xf32> to vector<2x4xf32>
      %81 = arith.subf %65, %80 : vector<2x4xf32>
      %82 = vector.broadcast %79 : vector<1x4xf32> to vector<2x4xf32>
      %83 = arith.mulf %82, %81 : vector<2x4xf32>
      %cst_52 = arith.constant 9.99999974E-6 : f32
      %84 = vector.broadcast %cst_52 : f32 to vector<1x4xf32>
      %85 = arith.addf %78, %84 : vector<1x4xf32>
      %86 = math.rsqrt %85 : vector<1x4xf32>
      %87 = vector.broadcast %86 : vector<1x4xf32> to vector<2x4xf32>
      %88 = arith.mulf %83, %87 : vector<2x4xf32>
      %c0_53 = arith.constant 0 : index
      %c0_54 = arith.constant 0 : index
      %89 = vector.load %arg10[%c0_53, %c0_54] : memref<1x4xf32, #tpu.memory_space<vmem>>, vector<1x4xf32>
      %90 = vector.broadcast %89 : vector<1x4xf32> to vector<2x4xf32>
      %91 = arith.addf %88, %90 : vector<2x4xf32>
      %92 = arith.negf %91 : vector<2x4xf32>
      %93 = math.exp %92 : vector<2x4xf32>
      %cst_55 = arith.constant 1.000000e+00 : f32
      %94 = vector.broadcast %cst_55 : f32 to vector<2x4xf32>
      %95 = arith.addf %94, %93 : vector<2x4xf32>
      %96 = arith.divf %94, %95 : vector<2x4xf32>
      %c0_56 = arith.constant 0 : index
      %c0_57 = arith.constant 0 : index
      %97 = vector.load %arg11[%c0_56, %c0_57] : memref<2x4xf32, #tpu.memory_space<vmem>>, vector<2x4xf32>
      tpu.vector_store %arg11[%c0_56, %c0_57], %96 {strides = array<i32>} : memref<2x4xf32, #tpu.memory_space<vmem>>, vector<2x4xf32>,
    } else {
    }
    return
  }
  func.func @transform_0(%arg0: i32) -> (i32, i32, i32) {
    %c0_i32 = arith.constant 0 : i32
    %c0_i32_0 = arith.constant 0 : i32
    %c0_i32_1 = arith.constant 0 : i32
    return %c0_i32, %c0_i32_0, %arg0 : i32, i32, i32
  }
  func.func @transform_1(%arg0: i32) -> (i32, i32) {
    %c0_i32 = arith.constant 0 : i32
    %c0_i32_0 = arith.constant 0 : i32
    %c0_i32_1 = arith.constant 0 : i32
    return %c0_i32, %c0_i32_0 : i32, i32
  }
  func.func @transform_2(%arg0: i32) -> (i32, i32) {
    %c0_i32 = arith.constant 0 : i32
    %c0_i32_0 = arith.constant 0 : i32
    %c0_i32_1 = arith.constant 0 : i32
    return %c0_i32, %c0_i32_0 : i32, i32
  }
  func.func @transform_3(%arg0: i32) -> (i32, i32) {
    %c0_i32 = arith.constant 0 : i32
    %c0_i32_0 = arith.constant 0 : i32
    %c0_i32_1 = arith.constant 0 : i32
    return %c0_i32, %c0_i32_0 : i32, i32
  }
  func.func @transform_4(%arg0: i32) -> (i32, i32) {
    %c0_i32 = arith.constant 0 : i32
    %c0_i32_0 = arith.constant 0 : i32
    %c0_i32_1 = arith.constant 0 : i32
    return %c0_i32, %c0_i32_0 : i32, i32
  }
  func.func @transform_5(%arg0: i32) -> (i32, i32) {
    %c0_i32 = arith.constant 0 : i32
    %c0_i32_0 = arith.constant 0 : i32
    %c0_i32_1 = arith.constant 0 : i32
    return %c0_i32, %c0_i32_0 : i32, i32
  }
  func.func @transform_6(%arg0: i32) -> (i32, i32) {
    %c0_i32 = arith.constant 0 : i32
    %c0_i32_0 = arith.constant 0 : i32
    %c0_i32_1 = arith.constant 0 : i32
    return %c0_i32, %c0_i32_0 : i32, i32
  }
  func.func @transform_7(%arg0: i32) -> (i32, i32) {
    %c0_i32 = arith.constant 0 : i32
    %c0_i32_0 = arith.constant 0 : i32
    %c0_i32_1 = arith.constant 0 : i32
    return %c0_i32, %c0_i32_0 : i32, i32
  }
  func.func @transform_8(%arg0: i32) -> (i32, i32) {
    %c0_i32 = arith.constant 0 : i32
    %c0_i32_0 = arith.constant 0 : i32
    %c0_i32_1 = arith.constant 0 : i32
    return %c0_i32, %c0_i32_0 : i32, i32
  }
  func.func @transform_9(%arg0: i32) -> (i32, i32) {
    %c0_i32 = arith.constant 0 : i32
    %c0_i32_0 = arith.constant 0 : i32
    %c0_i32_1 = arith.constant 0 : i32
    return %c0_i32, %c0_i32_0 : i32, i32
  }
  func.func @transform_10(%arg0: i32) -> (i32, i32) {
    %c0_i32 = arith.constant 0 : i32
    %c0_i32_0 = arith.constant 0 : i32
    %c0_i32_1 = arith.constant 0 : i32
    return %c0_i32, %c0_i32_0 : i32, i32
  }
}

</mosaic_0001>

<llo_original>
// kernel: tpu_custom_call.1
$region0: #{tpu_custom_call.1}
  #allocation0 [shape = 'u32[]', space=smem, size = 0x4, offset = 0x4, fixed_abs, tag = 'smem constant byte address 0x4 - core index']
  #allocation1 [shape = 'u32[144,128]{1,0:T(1,128)}', space=vmem, size = 0x12000, scoped, tag = 'internal scratch']
  #allocation2 [shape = 'f32[2,4]{1,0:T(2,128)}', space=vmem, size = 0x400, scoped, tag = 'scratch operand']
  #allocation3 [shape = 'f32[2,4]{1,0:T(2,128)}', space=vmem, size = 0x400, scoped, tag = 'scratch operand']
  %s0 = inlined_call_operand.vmem [shape: f32[2,4,16], index: 0, kind: input, shape index: {}]
  %s1 = inlined_call_operand.vmem [shape: f32[4,8], index: 1, kind: input, shape index: {}]
  %s2 = inlined_call_operand.hbm [shape: f32[4,8], index: 2, kind: input, shape index: {}]
  %s3 = inlined_call_operand.vmem [shape: f32[1,8], index: 3, kind: input, shape index: {}]
  %s4 = inlined_call_operand.vmem [shape: f32[1,8], index: 4, kind: input, shape index: {}]
  %s5 = inlined_call_operand.vmem [shape: f32[1,8], index: 5, kind: input, shape index: {}]
  %s6 = inlined_call_operand.vmem [shape: f32[8,4], index: 6, kind: input, shape index: {}]
  %s7 = inlined_call_operand.vmem [shape: f32[1,4], index: 7, kind: input, shape index: {}]
  %s8 = inlined_call_operand.vmem [shape: f32[1,4], index: 8, kind: input, shape index: {}]
  %s9 = inlined_call_operand.vmem [shape: f32[1,4], index: 9, kind: input, shape index: {}]
  %s10 = inlined_call_operand.hbm [shape: f32[2,4], index: 10, kind: output, shape index: {}]
  %s11 = sld [smem:[#allocation0]]
  $region62: #{tpu_custom_call.1} parent=0
    _
  %s13 = ssub.s32 1, %s11
  %s14 = scalar_select 0, %s13, %s11
  $region1: #{tpu_custom_call.1} parent=0
    #allocation4 [shape = 'u8[2048]{0}', space=vmem, size = 0x800, scoped, tag = 'input window, operand 2, single buffered']
    #allocation5 [shape = 's32[1]{0}', space=sflag, size = 0x4, scoped, tag = 'scoped memory for tpu_custom_call.1']
    #allocation6 [shape = 's32[1]{0}', space=sflag, size = 0x4, scoped, tag = 'scoped memory for tpu_custom_call.1']
    #allocation7 [shape = 'u8[1024]{0}', space=vmem, size = 0x400, scoped, tag = 'output window, operand 0, single buffered']
    %15 = vsyncpa [#allocation5], 0
    %16 = vsyncpa [#allocation6], 0
    // Predicated region
    $region2: #{tpu_custom_call.1} parent=1 // pred_check
      _
    $region3: #{tpu_custom_call.1} parent=1 // pred_check_branch
      %18 = sbr.rel (0) target = $region5
    $region4: #{tpu_custom_call.1} parent=1 // pred_region
      _
    $region5: #{tpu_custom_call.1} parent=1 // pred_fallthru
      _
    // Predicated region
    $region6: #{tpu_custom_call.1} parent=1 // pred_check
      _
    $region7: #{tpu_custom_call.1} parent=1 // pred_check_branch
      %20 = sbr.rel (0) target = $region9
    $region8: #{tpu_custom_call.1} parent=1 // pred_region
      _
    $region9: #{tpu_custom_call.1} parent=1 // pred_fallthru
      _
    // Predicated region
    $region10: #{tpu_custom_call.1} parent=1 // pred_check
      _
    $region11: #{tpu_custom_call.1} parent=1 // pred_check_branch
      %22 = sbr.rel (0) target = $region13
    $region12: #{tpu_custom_call.1} parent=1 // pred_region
      %s24 = ssub.s32 64, 64
      %25 = vsyncadd [#allocation5], %s24
      %s27 = sshll.u32 [#allocation4], 4
      %s28 = int_to_ptr.vmem [resolvable:$true] %s27
      %30 = dma.hbm_to_vmem [thread:$0]  %s2, 64, %s28, [#allocation5]
    $region13: #{tpu_custom_call.1} parent=1 // pred_fallthru
      _
    // Predicated region
    $region14: #{tpu_custom_call.1} parent=1 // pred_check
      _
    $region15: #{tpu_custom_call.1} parent=1 // pred_check_branch
      %32 = sbr.rel (0) target = $region17
    $region16: #{tpu_custom_call.1} parent=1 // pred_region
      _
    $region17: #{tpu_custom_call.1} parent=1 // pred_fallthru
      _
    // Predicated region
    $region18: #{tpu_custom_call.1} parent=1 // pred_check
      _
    $region19: #{tpu_custom_call.1} parent=1 // pred_check_branch
      %34 = sbr.rel (0) target = $region21
    $region20: #{tpu_custom_call.1} parent=1 // pred_region
      _
    $region21: #{tpu_custom_call.1} parent=1 // pred_fallthru
      _
    // Predicated region
    $region22: #{tpu_custom_call.1} parent=1 // pred_check
      _
    $region23: #{tpu_custom_call.1} parent=1 // pred_check_branch
      %36 = sbr.rel (0) target = $region25
    $region24: #{tpu_custom_call.1} parent=1 // pred_region
      _
    $region25: #{tpu_custom_call.1} parent=1 // pred_fallthru
      _
    // Predicated region
    $region26: #{tpu_custom_call.1} parent=1 // pred_check
      _
    $region27: #{tpu_custom_call.1} parent=1 // pred_check_branch
      %38 = sbr.rel (0) target = $region29
    $region28: #{tpu_custom_call.1} parent=1 // pred_region
      _
    $region29: #{tpu_custom_call.1} parent=1 // pred_fallthru
      _
    // Predicated region
    $region30: #{tpu_custom_call.1} parent=1 // pred_check
      _
    $region31: #{tpu_custom_call.1} parent=1 // pred_check_branch
      %40 = sbr.rel (0) target = $region33
    $region32: #{tpu_custom_call.1} parent=1 // pred_region
      _
    $region33: #{tpu_custom_call.1} parent=1 // pred_fallthru
      _
    // Predicated region
    $region34: #{tpu_custom_call.1} parent=1 // pred_check
      _
    $region35: #{tpu_custom_call.1} parent=1 // pred_check_branch
      %42 = sbr.rel (0) target = $region37
    $region36: #{tpu_custom_call.1} parent=1 // pred_region
      _
    $region37: #{tpu_custom_call.1} parent=1 // pred_fallthru
      _
    // Predicated region
    $region38: #{tpu_custom_call.1} parent=1 // pred_check
      _
    $region39: #{tpu_custom_call.1} parent=1 // pred_check_branch
      %44 = sbr.rel (0) target = $region41
    $region40: #{tpu_custom_call.1} parent=1 // pred_region
      _
    $region41: #{tpu_custom_call.1} parent=1 // pred_fallthru
      _
    // Predicated region
    $region42: #{tpu_custom_call.1} parent=1 // pred_check
      _
    $region43: #{tpu_custom_call.1} parent=1 // pred_check_branch
      %46 = sbr.rel (0) target = $region45
    $region44: #{tpu_custom_call.1} parent=1 // pred_region
      %47 = dma.done [#allocation5], 64
    $region45: #{tpu_custom_call.1} parent=1 // pred_fallthru
      _
    %p48 = scmp.eq.s32.totalorder 0, 0
    // Predicated region
    $region46: #{tpu_custom_call.1} parent=1 // pred_check
      %p49 = pneg %p48
    $region47: #{tpu_custom_call.1} parent=1 // pred_check_branch
      %51 = sbr.rel (%p49) target = $region49
    $region48: #{tpu_custom_call.1} parent=1 // pred_region
      %vm52 = vcmask 25600
      %53 = vst.msk [vmem:[#allocation2] sm:$0x3] %vm52, 0.0
      %54 = vst.msk [vmem:[#allocation3] sm:$0x3] %vm52, 0.0
    $region49: #{tpu_custom_call.1} parent=1 // pred_fallthru
      _
    %v55 = vld [vmem:[%s0] sm:$0xf]
    %v56 = vld [vmem:[%s0 + $0x4] sm:$0xf]
    %v57 = vld [vmem:[#allocation2] sm:$0x3]
    %v58 = vmax.f32 %v55, 0.0
    %v59 = vmax.f32 %v56, 0.0
    %vm60 = vcmask 125952
    %v61 = vsel %vm60, %v58, 0.0
    %62 = vadd.xlane.f32.xlu0 %v61
    %v63 = vpop.xlane.xlu0 %62
    %v64 = vsel %vm60, %v59, 0.0
    %65 = vadd.xlane.f32.xlu0 %v64
    %v66 = vpop.xlane.xlu0 %65
    %v69 = vlaneseq
    %v70 = vand.u32 %v69, 127
    %v71 = vlaneseq
    %v72 = vshrl.u32 %v71, 7
    %v73 = vsub.s32 %v70, %v72
    %v74 = vrot.slane %v63, %v73
    %v75 = vlaneseq
    %v76 = vshrl.u32 %v75, 7
    %v77 = vsub.s32 %v70, %v76
    %v78 = vrot.slane %v66, %v77
    %vm79 = vcmask 1041409
    %v80 = vsel %vm79, %v78, %v74
    %v82 = vadd.f32 %v57, %v80
    %vm83 = vcmask 25600
    %84 = vst.msk [vmem:[#allocation2] sm:$0x3] %vm83, %v82
    %v85 = vld [vmem:[#allocation3] sm:$0x3]
    %v86 = vsel %vm60, %v55, 0.0
    %87 = vadd.xlane.f32.xlu0 %v86
    %v88 = vpop.xlane.xlu0 %87
    %v89 = vsel %vm60, %v56, 0.0
    %90 = vadd.xlane.f32.xlu0 %v89
    %v91 = vpop.xlane.xlu0 %90
    %v94 = vlaneseq
    %v95 = vshrl.u32 %v94, 7
    %v96 = vsub.s32 %v70, %v95
    %v97 = vrot.slane %v88, %v96
    %v98 = vlaneseq
    %v99 = vshrl.u32 %v98, 7
    %v100 = vsub.s32 %v70, %v99
    %v101 = vrot.slane %v91, %v100
    %v102 = vsel %vm79, %v101, %v97
    %v104 = vadd.f32 %v85, %v102
    %105 = vst.msk [vmem:[#allocation3] sm:$0x3] %vm83, %v104
    // Predicated region
    $region50: #{tpu_custom_call.1} parent=1 // pred_check
      %p106 = pneg %p48
    $region51: #{tpu_custom_call.1} parent=1 // pred_check_branch
      %108 = sbr.rel (%p106) target = $region53
    $region52: #{tpu_custom_call.1} parent=1 // pred_region
      %v109 = vld [vmem:[#allocation2] sm:$0x3]
      %v110 = vmul.f32 %v109, 0.0625
      %v111 = vld [vmem:[#allocation3] sm:$0x3]
      %v112 = vsub.f32 %v111, %v109
      %v113 = vmul.f32 %v112, 0.0625
      %v114 = vld [vmem:[%s1] sm:$0xf]
      %v115 = vld [vmem:[#allocation4] sm:$0xf]
      %vm116 = vcmask 31744
      %v118 = vsel %vm116, %v113, 0
      %vm120 = vcmask 1043456
      %v122 = vsel %vm120, %v115, 0
      %124 = vmatprep.subr.mxu0 0.0
      %125 = vmatpush1.msra.mxu0 %v122
      %126 = vmatprep.subr.mxu0 0.0
      %127 = vmatpush1.msra.mxu0 0.0
      %128 = vmatprep.subr.mxu0 0.0
      %129 = vmatpush1.msra.mxu0 0.0
      %130 = vmatprep.subr.mxu0 0.0
      %131 = vmatpush1.msra.mxu0 0.0
      %132 = vmatprep.subr.mxu0 0.0
      %133 = vmatpush1.msra.mxu0 0.0
      %134 = vmatprep.subr.mxu0 0.0
      %135 = vmatpush1.msra.mxu0 0.0
      %136 = vmatprep.subr.mxu0 0.0
      %137 = vmatpush1.msra.mxu0 0.0
      %138 = vmatprep.subr.mxu0 0.0
      %139 = vmatpush1.msra.mxu0 0.0
      %140 = vmatprep.subr.mxu0 0.0
      %141 = vmatpush1.msra.mxu0 0.0
      %142 = vmatprep.subr.mxu0 0.0
      %143 = vmatpush1.msra.mxu0 0.0
      %144 = vmatprep.subr.mxu0 0.0
      %145 = vmatpush1.msra.mxu0 0.0
      %146 = vmatprep.subr.mxu0 0.0
      %147 = vmatpush1.msra.mxu0 0.0
      %148 = vmatprep.subr.mxu0 0.0
      %149 = vmatpush1.msra.mxu0 0.0
      %150 = vmatprep.subr.mxu0 0.0
      %151 = vmatpush1.msra.mxu0 0.0
      %152 = vmatprep.subr.mxu0 0.0
      %153 = vmatpush1.msra.mxu0 0.0
      %154 = vmatprep.subr.mxu0 0.0
      %155 = vmatpush1.msra.mxu0 0.0
      %156 = vmatprep.subr.mxu0 0.0
      %157 = vmatpush1.msra.mxu0 0.0
      %158 = vmatprep.subr.mxu0 0.0
      %159 = vmatpush1.msra.mxu0 0.0
      %160 = vmatprep.subr.mxu0 0.0
      %161 = vmatpush1.msra.mxu0 0.0
      %162 = vmatprep.subr.mxu0 0.0
      %163 = vmatpush1.msra.mxu0 0.0
      %164 = vmatprep.subr.mxu0 0.0
      %165 = vmatpush1.msra.mxu0 0.0
      %166 = vmatprep.subr.mxu0 0.0
      %167 = vmatpush1.msra.mxu0 0.0
      %168 = vmatprep.subr.mxu0 0.0
      %169 = vmatpush1.msra.mxu0 0.0
      %170 = vmatprep.subr.mxu0 0.0
      %171 = vmatpush1.msra.mxu0 0.0
      %172 = vmatprep.subr.mxu0 0.0
      %173 = vmatpush1.msra.mxu0 0.0
      %174 = vmatprep.subr.mxu0 0.0
      %175 = vmatpush1.msra.mxu0 0.0
      %176 = vmatprep.subr.mxu0 0.0
      %177 = vmatpush1.msra.mxu0 0.0
      %178 = vmatprep.subr.mxu0 0.0
      %179 = vmatpush1.msra.mxu0 0.0
      %180 = vmatprep.subr.mxu0 0.0
      %181 = vmatpush1.msra.mxu0 0.0
      %182 = vmatprep.subr.mxu0 0.0
      %183 = vmatpush1.msra.mxu0 0.0
      %184 = vmatprep.subr.mxu0 0.0
      %185 = vmatpush1.msra.mxu0 0.0
      %186 = vmatprep.subr.mxu0 0.0
      %187 = vmatpush1.msra.mxu0 0.0
      %188 = vmatprep.mubr.f32.mxu0 0.0
      %189 = vmatmul.mubr.f32.gmra.mrb[0].mxu0 %v118
      %v190 = vpop.f32.mrb[0].mxu0
      %v191 = vadd.f32 0.0, %v190
      %v192 = vpop.f32.mrb[0].mxu0
      %193 = vdwg.mxu0
      %v195 = vsel %vm116, %v110, 0
      %v198 = vsel %vm120, %v114, 0
      %200 = vmatprep.subr.mxu0 0.0
      %201 = vmatpush1.msra.mxu0 %v198
      %202 = vmatprep.subr.mxu0 0.0
      %203 = vmatpush1.msra.mxu0 0.0
      %204 = vmatprep.subr.mxu0 0.0
      %205 = vmatpush1.msra.mxu0 0.0
      %206 = vmatprep.subr.mxu0 0.0
      %207 = vmatpush1.msra.mxu0 0.0
      %208 = vmatprep.subr.mxu0 0.0
      %209 = vmatpush1.msra.mxu0 0.0
      %210 = vmatprep.subr.mxu0 0.0
      %211 = vmatpush1.msra.mxu0 0.0
      %212 = vmatprep.subr.mxu0 0.0
      %213 = vmatpush1.msra.mxu0 0.0
      %214 = vmatprep.subr.mxu0 0.0
      %215 = vmatpush1.msra.mxu0 0.0
      %216 = vmatprep.subr.mxu0 0.0
      %217 = vmatpush1.msra.mxu0 0.0
      %218 = vmatprep.subr.mxu0 0.0
      %219 = vmatpush1.msra.mxu0 0.0
      %220 = vmatprep.subr.mxu0 0.0
      %221 = vmatpush1.msra.mxu0 0.0
      %222 = vmatprep.subr.mxu0 0.0
      %223 = vmatpush1.msra.mxu0 0.0
      %224 = vmatprep.subr.mxu0 0.0
      %225 = vmatpush1.msra.mxu0 0.0
      %226 = vmatprep.subr.mxu0 0.0
      %227 = vmatpush1.msra.mxu0 0.0
      %228 = vmatprep.subr.mxu0 0.0
      %229 = vmatpush1.msra.mxu0 0.0
      %230 = vmatprep.subr.mxu0 0.0
      %231 = vmatpush1.msra.mxu0 0.0
      %232 = vmatprep.subr.mxu0 0.0
      %233 = vmatpush1.msra.mxu0 0.0
      %234 = vmatprep.subr.mxu0 0.0
      %235 = vmatpush1.msra.mxu0 0.0
      %236 = vmatprep.subr.mxu0 0.0
      %237 = vmatpush1.msra.mxu0 0.0
      %238 = vmatprep.subr.mxu0 0.0
      %239 = vmatpush1.msra.mxu0 0.0
      %240 = vmatprep.subr.mxu0 0.0
      %241 = vmatpush1.msra.mxu0 0.0
      %242 = vmatprep.subr.mxu0 0.0
      %243 = vmatpush1.msra.mxu0 0.0
      %244 = vmatprep.subr.mxu0 0.0
      %245 = vmatpush1.msra.mxu0 0.0
      %246 = vmatprep.subr.mxu0 0.0
      %247 = vmatpush1.msra.mxu0 0.0
      %248 = vmatprep.subr.mxu0 0.0
      %249 = vmatpush1.msra.mxu0 0.0
      %250 = vmatprep.subr.mxu0 0.0
      %251 = vmatpush1.msra.mxu0 0.0
      %252 = vmatprep.subr.mxu0 0.0
      %253 = vmatpush1.msra.mxu0 0.0
      %254 = vmatprep.subr.mxu0 0.0
      %255 = vmatpush1.msra.mxu0 0.0
      %256 = vmatprep.subr.mxu0 0.0
      %257 = vmatpush1.msra.mxu0 0.0
      %258 = vmatprep.subr.mxu0 0.0
      %259 = vmatpush1.msra.mxu0 0.0
      %260 = vmatprep.subr.mxu0 0.0
      %261 = vmatpush1.msra.mxu0 0.0
      %262 = vmatprep.subr.mxu0 0.0
      %263 = vmatpush1.msra.mxu0 0.0
      %264 = vmatprep.mubr.f32.mxu0 0.0
      %265 = vmatmul.mubr.f32.gmra.mrb[0].mxu0 %v195
      %v266 = vpop.f32.mrb[0].mxu0
      %v267 = vadd.f32 %v191, %v266
      %v268 = vpop.f32.mrb[0].mxu0
      %269 = vdwg.mxu0
      %v270 = vld [vmem:[%s3] sm:$0x1]
      %v272 = vlaneseq
      %v273 = vshrl.u32 %v272, 7
      %v274 = vsub.s32 0, %v273
      %v275 = vrot.slane %v270, %v274
      %v277 = vadd.f32 %v267, %v275
      %vm278 = vcmask 58368
      %v279 = vsel %vm278, %v277, 0.0
      %v280 = vrot.slane %v279, 4
      %v281 = vadd.f32 %v279, %v280
      %v282 = vrot.slane %v281, 2
      %v283 = vadd.f32 %v281, %v282
      %v284 = vrot.slane %v283, 1
      %v285 = vadd.f32 %v283, %v284
      %v286 = vrcp.pop 2.0
      %v287 = vmul.f32 %v285, %v286
      %v288 = vsub.f32 %v277, %v287
      %v289 = vmul.f32 %v288, %v288
      %v290 = vsel %vm278, %v289, 0.0
      %v291 = vrot.slane %v290, 4
      %v292 = vadd.f32 %v290, %v291
      %v293 = vrot.slane %v292, 2
      %v294 = vadd.f32 %v292, %v293
      %v295 = vrot.slane %v294, 1
      %v296 = vadd.f32 %v294, %v295
      %v297 = vmul.f32 %v296, %v286
      %v298 = vld [vmem:[%s4] sm:$0x1]
      %v300 = vlaneseq
      %v301 = vshrl.u32 %v300, 7
      %v302 = vsub.s32 0, %v301
      %v303 = vrot.slane %v298, %v302
      %v305 = vmul.f32 %v303, %v288
      %v306 = vadd.f32 %v297, 1e-05
      %v307 = vrsqrt.pop %v306
      %v308 = vmul.f32 %v305, %v307
      %v309 = vld [vmem:[%s5] sm:$0x1]
      %v311 = vlaneseq
      %v312 = vshrl.u32 %v311, 7
      %v313 = vsub.s32 0, %v312
      %v314 = vrot.slane %v309, %v313
      %v316 = vadd.f32 %v308, %v314
      %v317 = vmax.f32 %v316, 0.0
      %v318 = vld [vmem:[%s6] sm:$0xff]
      %v319 = vld [vmem:[%s7] sm:$0x1]
      %v321 = vlaneseq
      %v322 = vshrl.u32 %v321, 7
      %v323 = vsub.s32 0, %v322
      %v324 = vrot.slane %v319, %v323
      %vm326 = vcmask 64512
      %v328 = vsel %vm326, %v317, 0
      %330 = vmatprep.subr.mxu0 0.0
      %331 = vmatpush1.msra.mxu0 %v318
      %332 = vmatprep.subr.mxu0 0.0
      %333 = vmatpush1.msra.mxu0 0.0
      %334 = vmatprep.subr.mxu0 0.0
      %335 = vmatpush1.msra.mxu0 0.0
      %336 = vmatprep.subr.mxu0 0.0
      %337 = vmatpush1.msra.mxu0 0.0
      %338 = vmatprep.subr.mxu0 0.0
      %339 = vmatpush1.msra.mxu0 0.0
      %340 = vmatprep.subr.mxu0 0.0
      %341 = vmatpush1.msra.mxu0 0.0
      %342 = vmatprep.subr.mxu0 0.0
      %343 = vmatpush1.msra.mxu0 0.0
      %344 = vmatprep.subr.mxu0 0.0
      %345 = vmatpush1.msra.mxu0 0.0
      %346 = vmatprep.subr.mxu0 0.0
      %347 = vmatpush1.msra.mxu0 0.0
      %348 = vmatprep.subr.mxu0 0.0
      %349 = vmatpush1.msra.mxu0 0.0
      %350 = vmatprep.subr.mxu0 0.0
      %351 = vmatpush1.msra.mxu0 0.0
      %352 = vmatprep.subr.mxu0 0.0
      %353 = vmatpush1.msra.mxu0 0.0
      %354 = vmatprep.subr.mxu0 0.0
      %355 = vmatpush1.msra.mxu0 0.0
      %356 = vmatprep.subr.mxu0 0.0
      %357 = vmatpush1.msra.mxu0 0.0
      %358 = vmatprep.subr.mxu0 0.0
      %359 = vmatpush1.msra.mxu0 0.0
      %360 = vmatprep.subr.mxu0 0.0
      %361 = vmatpush1.msra.mxu0 0.0
      %362 = vmatprep.subr.mxu0 0.0
      %363 = vmatpush1.msra.mxu0 0.0
      %364 = vmatprep.subr.mxu0 0.0
      %365 = vmatpush1.msra.mxu0 0.0
      %366 = vmatprep.subr.mxu0 0.0
      %367 = vmatpush1.msra.mxu0 0.0
      %368 = vmatprep.subr.mxu0 0.0
      %369 = vmatpush1.msra.mxu0 0.0
      %370 = vmatprep.subr.mxu0 0.0
      %371 = vmatpush1.msra.mxu0 0.0
      %372 = vmatprep.subr.mxu0 0.0
      %373 = vmatpush1.msra.mxu0 0.0
      %374 = vmatprep.subr.mxu0 0.0
      %375 = vmatpush1.msra.mxu0 0.0
      %376 = vmatprep.subr.mxu0 0.0
      %377 = vmatpush1.msra.mxu0 0.0
      %378 = vmatprep.subr.mxu0 0.0
      %379 = vmatpush1.msra.mxu0 0.0
      %380 = vmatprep.subr.mxu0 0.0
      %381 = vmatpush1.msra.mxu0 0.0
      %382 = vmatprep.subr.mxu0 0.0
      %383 = vmatpush1.msra.mxu0 0.0
      %384 = vmatprep.subr.mxu0 0.0
      %385 = vmatpush1.msra.mxu0 0.0
      %386 = vmatprep.subr.mxu0 0.0
      %387 = vmatpush1.msra.mxu0 0.0
      %388 = vmatprep.subr.mxu0 0.0
      %389 = vmatpush1.msra.mxu0 0.0
      %390 = vmatprep.subr.mxu0 0.0
      %391 = vmatpush1.msra.mxu0 0.0
      %392 = vmatprep.subr.mxu0 0.0
      %393 = vmatpush1.msra.mxu0 0.0
      %394 = vmatprep.mubr.f32.mxu0 0.0
      %395 = vmatmul.mubr.f32.gmra.mrb[0].mxu0 %v328
      %v396 = vpop.f32.mrb[0].mxu0
      %v397 = vadd.f32 %v324, %v396
      %v398 = vpop.f32.mrb[0].mxu0
      %399 = vdwg.mxu0
      %v400 = vsel %vm83, %v397, 0.0
      %v401 = vrot.slane %v400, 4
      %v402 = vadd.f32 %v400, %v401
      %v403 = vrot.slane %v402, 2
      %v404 = vadd.f32 %v402, %v403
      %v405 = vrot.slane %v404, 1
      %v406 = vadd.f32 %v404, %v405
      %v407 = vmul.f32 %v406, %v286
      %v408 = vsub.f32 %v397, %v407
      %v409 = vmul.f32 %v408, %v408
      %v410 = vsel %vm83, %v409, 0.0
      %v411 = vrot.slane %v410, 4
      %v412 = vadd.f32 %v410, %v411
      %v413 = vrot.slane %v412, 2
      %v414 = vadd.f32 %v412, %v413
      %v415 = vrot.slane %v414, 1
      %v416 = vadd.f32 %v414, %v415
      %v417 = vmul.f32 %v416, %v286
      %v418 = vld [vmem:[%s8] sm:$0x1]
      %v420 = vlaneseq
      %v421 = vshrl.u32 %v420, 7
      %v422 = vsub.s32 0, %v421
      %v423 = vrot.slane %v418, %v422
      %v425 = vmul.f32 %v423, %v408
      %v426 = vadd.f32 %v417, 1e-05
      %v427 = vrsqrt.pop %v426
      %v428 = vmul.f32 %v425, %v427
      %v429 = vld [vmem:[%s9] sm:$0x1]
      %v431 = vlaneseq
      %v432 = vshrl.u32 %v431, 7
      %v433 = vsub.s32 0, %v432
      %v434 = vrot.slane %v429, %v433
      %v436 = vadd.f32 %v428, %v434
      %v437 = vxor.u32 %v436, 2147483648
      %v438 = vmul.f32 %v437, 1.442695
      %v439 = vpow.pop %v438
      %v440 = vadd.f32 %v439, 1.0
      %v441 = vrcp.pop %v440
      %v442 = vmul.f32 1.0, %v441
      %443 = vst.msk [vmem:[#allocation7] sm:$0x3] %vm83, %v442
    $region53: #{tpu_custom_call.1} parent=1 // pred_fallthru
      _
    // Predicated region
    $region54: #{tpu_custom_call.1} parent=1 // pred_check
      _
    $region55: #{tpu_custom_call.1} parent=1 // pred_check_branch
      %445 = sbr.rel (0) target = $region57
    $region56: #{tpu_custom_call.1} parent=1 // pred_region
      %s447 = ssub.s32 32, 32
      %448 = vsyncadd [#allocation6], %s447
      %s450 = sshll.u32 [#allocation7], 4
      %s451 = int_to_ptr.vmem [resolvable:$true] %s450
      %453 = dma.vmem_to_hbm [thread:$0]  %s451, 32, %s10, [#allocation6]
    $region57: #{tpu_custom_call.1} parent=1 // pred_fallthru
      _
    // Predicated region
    $region58: #{tpu_custom_call.1} parent=1 // pred_check
      _
    $region59: #{tpu_custom_call.1} parent=1 // pred_check_branch
      %455 = sbr.rel (0) target = $region61
    $region60: #{tpu_custom_call.1} parent=1 // pred_region
      %456 = dma.done [#allocation6], 32
    $region61: #{tpu_custom_call.1} parent=1 // pred_fallthru
      _
    %457 = vsyncpa [#allocation5], 1
    %458 = vsyncpa [#allocation6], 1

</llo_original>
